<compile_context>
chip_gen: v5e
topology: v5e:2x2
jax: 0.10.0
libtpu: 0.0.40
codegen_flags: <defaults>
</compile_context>

<pallas_src>
import jax
import jax.numpy as jnp
from jax.experimental import pallas as pl
from jax.experimental.pallas import tpu as pltpu


def _make_deepset_kernel(nc):
    """Build the per-grid-step DeepSet kernel for a fixed (static) context size."""
    inv_nc = 1.0 / float(nc)

    def kernel(ctx_ref, w1_ref, b1_ref, w2_ref, b2_ref, out_ref):
        """One grid step: B batch elements of the DeepSet (MLP + masked mean).

        ctx_ref : (B, nc_pad, dx+dy) bf16   pre-concatenated [xc || yc] rows
        w1_ref  : (dx+dy, dh_pad)    bf16   folded first-layer weights (y_encoder fused)
        b1_ref  : (1, dh_pad)        f32
        w2_ref  : (dh_pad, dz_pad)   bf16
        b2_ref  : (1, dz_pad)        f32
        out_ref : (1, B, dz_pad)     f32    zc for the B batch elements of this step
        """
        B, ncp, dctx = ctx_ref.shape
        dzp = out_ref.shape[-1]

        # Flatten (B, nc_pad) -> one GEMM M-dimension.  nc_pad is a multiple of
        # 16, so this merge is a layout no-op for the bf16 sublane packing.
        ctx = ctx_ref[...].reshape(B * ncp, dctx)

        # MLP (lane-dense: dh_pad = dz_pad = 128).  bf16 operands, f32 accum;
        # bias / ReLU in f32 (no bf16 VPU on v5e).  Padded *columns* stay zero
        # (zero weights + zero bias -> relu(0) = 0).
        h = jnp.dot(ctx, w1_ref[...], preferred_element_type=jnp.float32) + b1_ref[...]
        h = jnp.maximum(h, 0.0)
        z = (jnp.dot(h.astype(jnp.bfloat16), w2_ref[...],
                     preferred_element_type=jnp.float32) + b2_ref[...])

        # Masked mean over the true context rows.  Zero-padded *rows* are NOT
        # zero after the MLP (relu(b1)@W2 + b2), so mask them before reducing.
        z = z.reshape(B, ncp, dzp)
        set_idx = jax.lax.broadcasted_iota(jnp.int32, (B, ncp, dzp), 1)
        z = jnp.where(set_idx < nc, z, 0.0)
        out_ref[0] = z.sum(axis=1) * inv_nc

    return kernel


def cnp_encoder(xc, yc, xt, params):
    """Pallas implementation of CNPEncoder.forward.

    xc: [m, nc, dx]   yc: [m, nc, dy]   xt: [m, nt, dx]  ->  [m, nt, dz + dx]
    """
    m, nc, dx = xc.shape
    dy = yc.shape[-1]
    nt = xt.shape[1]

    wy, by = params["wy"], params["by"]          # y_encoder Linear(dy -> de)
    w1, b1 = params["w1"], params["b1"]          # z_encoder layer 1 (dx+de -> dh)
    w2, b2 = params["w2"], params["b2"]          # z_encoder layer 2 (dh -> dz)
    dh = w1.shape[1]
    dz = w2.shape[1]

    LANE = 128
    SUB = 16                                     # bf16 sublane packing
    dh_pad = max(LANE, ((dh + LANE - 1) // LANE) * LANE)
    dz_pad = max(LANE, ((dz + LANE - 1) // LANE) * LANE)
    nc_pad = ((nc + SUB - 1) // SUB) * SUB
    dctx = dx + dy

    # ---- Algebraic fold of the y_encoder into W1 (done once, at trace time).
    #   relu([xc, yc@Wy+by] @ W1 + b1) = relu([xc || yc] @ W1_eff + b1_eff)
    w1_x = w1[:dx]                                            # (dx, dh)
    w1_y = wy @ w1[dx:]                                       # (dy, dh)
    w1_eff = jnp.concatenate([w1_x, w1_y], axis=0)            # (dx+dy, dh)
    b1_eff = by @ w1[dx:] + b1                                # (1, dh)

    def pad2(a, rows, cols):
        return jnp.pad(a, ((0, rows - a.shape[0]), (0, cols - a.shape[1])))

    w1_p = pad2(w1_eff, dctx, dh_pad).astype(jnp.bfloat16)    # bf16 MXU operand
    b1_p = pad2(b1_eff, 1, dh_pad)                            # f32
    w2_p = pad2(w2, dh_pad, dz_pad).astype(jnp.bfloat16)      # bf16 MXU operand
    b2_p = pad2(b2, 1, dz_pad)                                # f32

    # ---- Pre-concatenate context inputs into one bf16 stream, pad the set axis.
    ctx = jnp.concatenate([xc, yc], axis=-1)                  # (m, nc, dx+dy)
    ctx = jnp.pad(ctx, ((0, 0), (0, nc_pad - nc), (0, 0)))    # (m, nc_pad, dctx)
    ctx = ctx.astype(jnp.bfloat16)                            # halves per-step DMA

    # ---- Batch B elements per grid step so each step runs a real GEMM.
    # ~2K rows amortizes the ~600-cycle per-step overhead; sweepable.
    target_rows = 2048
    B = max(1, min(m, target_rows // nc_pad))
    if m >= 2:
        # Keep >= 2 grid steps so the "parallel" axis shards across both
        # TensorCores on v7x (no-op on single-TC v5e/v6e).
        B = min(B, (m + 1) // 2)
    m_pad = ((m + B - 1) // B) * B
    ctx = jnp.pad(ctx, ((0, m_pad - m), (0, 0), (0, 0)))
    n_steps = m_pad // B

    zc = pl.pallas_call(
        _make_deepset_kernel(nc),
        out_shape=jax.ShapeDtypeStruct((n_steps, B, dz_pad), jnp.float32),
        grid=(n_steps,),
        in_specs=[
            pl.BlockSpec((B, nc_pad, dctx), lambda g: (g, 0, 0)),   # ctx (bf16)
            pl.BlockSpec((dctx, dh_pad), lambda g: (0, 0)),         # W1 (folded, bf16)
            pl.BlockSpec((1, dh_pad), lambda g: (0, 0)),            # b1 (folded, f32)
            pl.BlockSpec((dh_pad, dz_pad), lambda g: (0, 0)),       # W2 (bf16)
            pl.BlockSpec((1, dz_pad), lambda g: (0, 0)),            # b2 (f32)
        ],
        out_specs=pl.BlockSpec((1, B, dz_pad), lambda g: (g, 0, 0)),
        compiler_params=pltpu.CompilerParams(
            dimension_semantics=("parallel",)),
    )(ctx, w1_p, b1_p, w2_p, b2_p)

    # ---- Glue (pure data movement, required by the module's return contract):
    # drop padding, repeat over targets, concat with xt.
    # TODO(synk): fuse into the downstream decoder kernel (consume zc[m,dz] and
    # xt separately with a per-target BlockSpec) — for large nt this repeat is
    # the dominant HBM traffic of the whole path.
    zc = zc.reshape(m_pad, dz_pad)[:m, :dz]                   # (m, dz)
    zc = jnp.broadcast_to(zc[:, None, :], (m, nt, dz))        # (m, nt, dz)
    return jnp.concatenate([zc, xt], axis=-1)                 # (m, nt, dz+dx)


def reference(xc, yc, xt, params):
    """Pure-JAX (f32) reference mirroring the PyTorch forward (unfused)."""
    yc_e = yc @ params["wy"] + params["by"]
    zin = jnp.concatenate([xc, yc_e], axis=-1)
    h = jnp.maximum(zin @ params["w1"] + params["b1"], 0.0)
    zd = h @ params["w2"] + params["b2"]
    zc = zd.mean(axis=1)                                      # [m, dz]
    zc = jnp.broadcast_to(zc[:, None, :], (xc.shape[0], xt.shape[1], zc.shape[-1]))
    return jnp.concatenate([zc, xt], axis=-1)


if __name__ == "__main__":
    key = jax.random.PRNGKey(0)
    m, nc, nt = 2, 8, 8
    dx, dy = 2, 1
    de, dh, dz = 16, 32, 32

    ks = jax.random.split(key, 12)
    xc = jax.random.normal(ks[0], (m, nc, dx), jnp.float32)
    yc = jax.random.normal(ks[1], (m, nc, dy), jnp.float32)
    xt = jax.random.normal(ks[2], (m, nt, dx), jnp.float32)

    params = {
        "wy": 0.3 * jax.random.normal(ks[3], (dy, de), jnp.float32),
        "by": 0.1 * jax.random.normal(ks[4], (1, de), jnp.float32),
        "w1": 0.2 * jax.random.normal(ks[5], (dx + de, dh), jnp.float32),
        "b1": 0.1 * jax.random.normal(ks[6], (1, dh), jnp.float32),
        "w2": 0.2 * jax.random.normal(ks[7], (dh, dz), jnp.float32),
        "b2": 0.1 * jax.random.normal(ks[8], (1, dz), jnp.float32),
    }

    out = cnp_encoder(xc, yc, xt, params)
    out = jax.block_until_ready(out)

    ref = reference(xc, yc, xt, params)
    assert out.shape == (m, nt, dz + dx), out.shape
    # bf16 MXU operands (f32 accumulation) -> looser tolerance than pure f32.
    assert jnp.allclose(out, ref, atol=2e-2, rtol=2e-2), float(jnp.abs(out - ref).max())

    print("KERNEL_OK")
</pallas_src>

<mosaic_0001>
module attributes {stable_mosaic.version = 11 : i64} {
  func.func @kernel(%arg0: i32, %arg1: memref<1x16x3xbf16, #tpu.memory_space<vmem>>, %arg2: memref<3x128xbf16, #tpu.memory_space<vmem>>, %arg3: memref<1x128xf32, #tpu.memory_space<vmem>>, %arg4: memref<128x128xbf16, #tpu.memory_space<vmem>>, %arg5: memref<1x128xf32, #tpu.memory_space<vmem>>, %arg6: memref<1x1x128xf32, #tpu.memory_space<vmem>>) attributes {dimension_semantics = [#tpu.dimension_semantics<parallel>], iteration_bounds = array<i64: 2>, scalar_prefetch = 0 : i64, scratch_operands = 0 : i64, tpu.core_type = #tpu.core_type<tc>, window_params = [{transform_indices = @transform_0, window_bounds = array<i64: 1, 16, 3>}, {pipeline_mode = #tpu.pipeline_mode<synchronous>, transform_indices = @transform_1, window_bounds = array<i64: 3, 128>}, {pipeline_mode = #tpu.pipeline_mode<synchronous>, transform_indices = @transform_2, window_bounds = array<i64: 1, 128>}, {pipeline_mode = #tpu.pipeline_mode<synchronous>, transform_indices = @transform_3, window_bounds = array<i64: 128, 128>}, {pipeline_mode = #tpu.pipeline_mode<synchronous>, transform_indices = @transform_4, window_bounds = array<i64: 1, 128>}, {transform_indices = @transform_5, window_bounds = array<i64: 1, 1, 128>}]} {
    %c0 = arith.constant 0 : index
    %c0_0 = arith.constant 0 : index
    %c0_1 = arith.constant 0 : index
    %0 = vector.load %arg1[%c0, %c0_0, %c0_1] : memref<1x16x3xbf16, #tpu.memory_space<vmem>>, vector<1x16x3xbf16>
    %1 = vector.shape_cast %0 : vector<1x16x3xbf16> to vector<16x3xbf16>
    %c0_2 = arith.constant 0 : index
    %c0_3 = arith.constant 0 : index
    %2 = vector.load %arg2[%c0_2, %c0_3] : memref<3x128xbf16, #tpu.memory_space<vmem>>, vector<3x128xbf16>
    %cst = arith.constant dense<0.000000e+00> : vector<16x128xf32>
    %3 = tpu.matmul %1, %2, %cst {dimension_numbers = #tpu.dot_dimension_numbers<[1], [0], [0], [1], [0, 0, 1, 1], [], []>} : vector<16x3xbf16>, vector<3x128xbf16>, vector<16x128xf32> -> vector<16x128xf32>
    %c0_4 = arith.constant 0 : index
    %c0_5 = arith.constant 0 : index
    %4 = vector.load %arg3[%c0_4, %c0_5] : memref<1x128xf32, #tpu.memory_space<vmem>>, vector<1x128xf32>
    %5 = vector.broadcast %4 : vector<1x128xf32> to vector<16x128xf32>
    %6 = arith.addf %3, %5 : vector<16x128xf32>
    %cst_6 = arith.constant 0.000000e+00 : f32
    %7 = vector.broadcast %cst_6 : f32 to vector<16x128xf32>
    %8 = arith.maximumf %6, %7 : vector<16x128xf32>
    %9 = arith.truncf %8 : vector<16x128xf32> to vector<16x128xbf16>
    %c0_7 = arith.constant 0 : index
    %c0_8 = arith.constant 0 : index
    %10 = vector.load %arg4[%c0_7, %c0_8] : memref<128x128xbf16, #tpu.memory_space<vmem>>, vector<128x128xbf16>
    %cst_9 = arith.constant dense<0.000000e+00> : vector<16x128xf32>
    %11 = tpu.matmul %9, %10, %cst_9 {dimension_numbers = #tpu.dot_dimension_numbers<[1], [0], [0], [1], [0, 0, 1, 1], [], []>} : vector<16x128xbf16>, vector<128x128xbf16>, vector<16x128xf32> -> vector<16x128xf32>
    %c0_10 = arith.constant 0 : index
    %c0_11 = arith.constant 0 : index
    %12 = vector.load %arg5[%c0_10, %c0_11] : memref<1x128xf32, #tpu.memory_space<vmem>>, vector<1x128xf32>
    %13 = vector.broadcast %12 : vector<1x128xf32> to vector<16x128xf32>
    %14 = arith.addf %11, %13 : vector<16x128xf32>
    %15 = vector.shape_cast %14 : vector<16x128xf32> to vector<1x16x128xf32>
    %16 = tpu.iota {dimensions = array<i32: 1>} : vector<1x16x128xi32>
    %c8_i32 = arith.constant 8 : i32
    %17 = vector.broadcast %c8_i32 : i32 to vector<1x16x128xi32>
    %18 = arith.cmpi slt, %16, %17 : vector<1x16x128xi32>
    %cst_12 = arith.constant 0.000000e+00 : f32
    %19 = vector.broadcast %cst_12 : f32 to vector<1x16x128xf32>
    %20 = arith.select %18, %15, %19 : vector<1x16x128xi1>, vector<1x16x128xf32>
    %cst_13 = arith.constant dense<0.000000e+00> : vector<1x128xf32>
    %21 = vector.multi_reduction <add>, %20, %cst_13 [1] : vector<1x16x128xf32> to vector<1x128xf32>
    %cst_14 = arith.constant 1.250000e-01 : f32
    %22 = vector.broadcast %cst_14 : f32 to vector<1x128xf32>
    %23 = arith.mulf %21, %22 : vector<1x128xf32>
    %c0_15 = arith.constant 0 : index
    %c0_16 = arith.constant 0 : index
    %c0_17 = arith.constant 0 : index
    %24 = vector.load %arg6[%c0_15, %c0_16, %c0_17] : memref<1x1x128xf32, #tpu.memory_space<vmem>>, vector<1x1x128xf32>
    %25 = vector.shape_cast %24 : vector<1x1x128xf32> to vector<1x128xf32>
    %26 = vector.shape_cast %23 : vector<1x128xf32> to vector<1x1x128xf32>
    tpu.vector_store %arg6[%c0_15, %c0_16, %c0_17], %26 {strides = array<i32>} : memref<1x1x128xf32, #tpu.memory_space<vmem>>, vector<1x1x128xf32>,
    return
  }
  func.func @transform_0(%arg0: i32) -> (i32, i32, i32) {
    %c0_i32 = arith.constant 0 : i32
    %c0_i32_0 = arith.constant 0 : i32
    %c0_i32_1 = arith.constant 0 : i32
    return %arg0, %c0_i32, %c0_i32_0 : i32, i32, i32
  }
  func.func @transform_1(%arg0: i32) -> (i32, i32) {
    %c0_i32 = arith.constant 0 : i32
    %c0_i32_0 = arith.constant 0 : i32
    %c0_i32_1 = arith.constant 0 : i32
    return %c0_i32, %c0_i32_0 : i32, i32
  }
  func.func @transform_2(%arg0: i32) -> (i32, i32) {
    %c0_i32 = arith.constant 0 : i32
    %c0_i32_0 = arith.constant 0 : i32
    %c0_i32_1 = arith.constant 0 : i32
    return %c0_i32, %c0_i32_0 : i32, i32
  }
  func.func @transform_3(%arg0: i32) -> (i32, i32) {
    %c0_i32 = arith.constant 0 : i32
    %c0_i32_0 = arith.constant 0 : i32
    %c0_i32_1 = arith.constant 0 : i32
    return %c0_i32, %c0_i32_0 : i32, i32
  }
  func.func @transform_4(%arg0: i32) -> (i32, i32) {
    %c0_i32 = arith.constant 0 : i32
    %c0_i32_0 = arith.constant 0 : i32
    %c0_i32_1 = arith.constant 0 : i32
    return %c0_i32, %c0_i32_0 : i32, i32
  }
  func.func @transform_5(%arg0: i32) -> (i32, i32, i32) {
    %c0_i32 = arith.constant 0 : i32
    %c0_i32_0 = arith.constant 0 : i32
    %c0_i32_1 = arith.constant 0 : i32
    return %arg0, %c0_i32, %c0_i32_0 : i32, i32, i32
  }
}

</mosaic_0001>

<llo_original>
// kernel: tpu_custom_call.1
$region0: #{tpu_custom_call.1}
  #allocation0 [shape = 'u32[]', space=smem, size = 0x4, offset = 0x4, fixed_abs, tag = 'smem constant byte address 0x4 - core index']
  #allocation1 [shape = 'u32[72,128]{1,0:T(1,128)}', space=vmem, size = 0x9000, scoped, tag = 'internal scratch']
  %s0 = inlined_call_operand.vmem [shape: bf16[2,16,3], index: 0, kind: input, shape index: {}]
  %s1 = inlined_call_operand.vmem [shape: bf16[3,128], index: 1, kind: input, shape index: {}]
  %s2 = inlined_call_operand.vmem [shape: f32[1,128], index: 2, kind: input, shape index: {}]
  %s3 = inlined_call_operand.hbm [shape: bf16[128,128], index: 3, kind: input, shape index: {}]
  %s4 = inlined_call_operand.vmem [shape: f32[1,128], index: 4, kind: input, shape index: {}]
  %s5 = inlined_call_operand.hbm [shape: f32[2,1,128], index: 5, kind: output, shape index: {}]
  %s6 = sld [smem:[#allocation0]]
  $region57: #{tpu_custom_call.1} parent=0
    _
  %s8 = ssub.s32 1, %s6
  %s9 = scalar_select 0, %s8, %s6
  $region1: #{tpu_custom_call.1} parent=0
    #allocation2 [shape = 'u8[32768]{0}', space=vmem, size = 0x8000, scoped, tag = 'input window, operand 3, single buffered']
    #allocation3 [shape = 's32[2]{0}', space=sflag, size = 0x8, scoped, tag = 'scoped memory for tpu_custom_call.1']
    #allocation4 [shape = 's32[2]{0}', space=sflag, size = 0x8, scoped, tag = 'scoped memory for tpu_custom_call.1']
    #allocation5 [shape = 'u8[1024]{0}', space=vmem, size = 0x400, scoped, tag = 'output window, operand 0']
    %10 = vsyncpa [#allocation3], 0
    %11 = vsyncpa [#allocation4], 0
    %s12 = scalar_lea.sflag [#allocation4], 1
    %13 = vsyncpa %s12, 0
    loop: start=0, step=1, limit=4
    $region2: #{tpu_custom_call.1} parent=1 // loop_pre_header
      _
    $region3: #{tpu_custom_call.1} parent=1 // loop_header
      %s15 = sphi 0, %s19
      %p16 = scmp.ge.s32.totalorder %s15, 4
      %s25 = sphi 0, %s27
      %s28 = sphi 0, %s25
      %s29 = sphi 0, %s28
      %s45 = sphi 0, %s29
      %s49 = sphi 0, %s49
      %s51 = sphi 0, %s49
      %s52 = sphi 0, %s51
      %s66 = sphi 0, %s52
      %s70 = sphi 0, %s70
      %s72 = sphi 0, %s70
      %s73 = sphi 0, %s72
      %s87 = sphi 0, %s73
      %s91 = sphi 0, %s91
      %s93 = sphi 0, %s91
      %s94 = sphi 0, %s93
      %s108 = sphi 0, %s94
      %s112 = sphi 0, %s112
      %s114 = sphi 0, %s112
      %s115 = sphi 0, %s114
      %s129 = sphi 0, %s115
      %s135 = sphi 0, %s137
      %s138 = sphi 0, %s135
      %s139 = sphi 0, %s138
      %s155 = sphi 0, %s139
    $region4: #{tpu_custom_call.1} parent=1 // loop_header_branch
      %18 = sbr.rel (%p16) target = $region8
    $region5: #{tpu_custom_call.1} parent=1 // loop_body
      %s20 = ssub.s32 %s15, 1
      %s21 = ssub.s32 %s15, 2
      %s22 = sadd.s32 %s15, 1
      %s23 = ssub.s32 %s15, %s22
      %p24 = scmp.eq.s32.totalorder %s23, 0
      %s26 = sadd.s32 %s25, 1
      %s27 = scalar_select %p24, %s25, %s26
      %p30 = pneg %p24
      %p31 = scmp.eq.s32.totalorder %s15, 1
      %p32 = por %p30, %p31
      %p33 = scmp.ne.s32.totalorder %s25, %s28
      %p34 = scmp.eq.s32.totalorder %s15, 0
      %p35 = por %p33, %p34
      %p36 = scmp.ne.s32.totalorder %s25, %s28
      %p37 = scmp.eq.s32.totalorder %s20, 1
      %p38 = por %p36, %p37
      %p39 = scmp.ne.s32.totalorder %s28, %s29
      %p40 = scmp.eq.s32.totalorder %s20, 0
      %p41 = por %p39, %p40
      %p42 = scmp.ne.s32.totalorder %s28, %s29
      %p43 = scmp.eq.s32.totalorder %s21, 1
      %p44 = por %p42, %p43
      %p46 = scmp.ne.s32.totalorder %s29, %s45
      %p47 = scmp.eq.s32.totalorder %s21, 0
      %p48 = por %p46, %p47
      %s50 = sadd.s32 %s49, 1
      %p53 = scmp.eq.s32.totalorder %s15, 1
      %p54 = scmp.ne.s32.totalorder %s49, %s51
      %p55 = scmp.eq.s32.totalorder %s15, 0
      %p56 = por %p54, %p55
      %p57 = scmp.ne.s32.totalorder %s49, %s51
      %p58 = scmp.eq.s32.totalorder %s20, 1
      %p59 = por %p57, %p58
      %p60 = scmp.ne.s32.totalorder %s51, %s52
      %p61 = scmp.eq.s32.totalorder %s20, 0
      %p62 = por %p60, %p61
      %p63 = scmp.ne.s32.totalorder %s51, %s52
      %p64 = scmp.eq.s32.totalorder %s21, 1
      %p65 = por %p63, %p64
      %p67 = scmp.ne.s32.totalorder %s52, %s66
      %p68 = scmp.eq.s32.totalorder %s21, 0
      %p69 = por %p67, %p68
      %s71 = sadd.s32 %s70, 1
      %p74 = scmp.eq.s32.totalorder %s15, 1
      %p75 = scmp.ne.s32.totalorder %s70, %s72
      %p76 = scmp.eq.s32.totalorder %s15, 0
      %p77 = por %p75, %p76
      %p78 = scmp.ne.s32.totalorder %s70, %s72
      %p79 = scmp.eq.s32.totalorder %s20, 1
      %p80 = por %p78, %p79
      %p81 = scmp.ne.s32.totalorder %s72, %s73
      %p82 = scmp.eq.s32.totalorder %s20, 0
      %p83 = por %p81, %p82
      %p84 = scmp.ne.s32.totalorder %s72, %s73
      %p85 = scmp.eq.s32.totalorder %s21, 1
      %p86 = por %p84, %p85
      %p88 = scmp.ne.s32.totalorder %s73, %s87
      %p89 = scmp.eq.s32.totalorder %s21, 0
      %p90 = por %p88, %p89
      %s92 = sadd.s32 %s91, 1
      %p95 = scmp.eq.s32.totalorder %s15, 1
      %p96 = scmp.ne.s32.totalorder %s91, %s93
      %p97 = scmp.eq.s32.totalorder %s15, 0
      %p98 = por %p96, %p97
      %p99 = scmp.ne.s32.totalorder %s91, %s93
      %p100 = scmp.eq.s32.totalorder %s20, 1
      %p101 = por %p99, %p100
      %p102 = scmp.ne.s32.totalorder %s93, %s94
      %p103 = scmp.eq.s32.totalorder %s20, 0
      %p104 = por %p102, %p103
      %p105 = scmp.ne.s32.totalorder %s93, %s94
      %p106 = scmp.eq.s32.totalorder %s21, 1
      %p107 = por %p105, %p106
      %p109 = scmp.ne.s32.totalorder %s94, %s108
      %p110 = scmp.eq.s32.totalorder %s21, 0
      %p111 = por %p109, %p110
      %s113 = sadd.s32 %s112, 1
      %p116 = scmp.eq.s32.totalorder %s15, 1
      %p117 = scmp.ne.s32.totalorder %s112, %s114
      %p118 = scmp.eq.s32.totalorder %s15, 0
      %p119 = por %p117, %p118
      %p120 = scmp.ne.s32.totalorder %s112, %s114
      %p121 = scmp.eq.s32.totalorder %s20, 1
      %p122 = por %p120, %p121
      %p123 = scmp.ne.s32.totalorder %s114, %s115
      %p124 = scmp.eq.s32.totalorder %s20, 0
      %p125 = por %p123, %p124
      %p126 = scmp.ne.s32.totalorder %s114, %s115
      %p127 = scmp.eq.s32.totalorder %s21, 1
      %p128 = por %p126, %p127
      %p130 = scmp.ne.s32.totalorder %s115, %s129
      %p131 = scmp.eq.s32.totalorder %s21, 0
      %p132 = por %p130, %p131
      %s133 = ssub.s32 %s15, %s22
      %p134 = scmp.eq.s32.totalorder %s133, 0
      %s136 = sadd.s32 %s135, 1
      %s137 = scalar_select %p134, %s135, %s136
      %p140 = pneg %p134
      %p141 = scmp.eq.s32.totalorder %s15, 1
      %p142 = por %p140, %p141
      %p143 = scmp.ne.s32.totalorder %s135, %s138
      %p144 = scmp.eq.s32.totalorder %s15, 0
      %p145 = por %p143, %p144
      %p146 = scmp.ne.s32.totalorder %s135, %s138
      %p147 = scmp.eq.s32.totalorder %s20, 1
      %p148 = por %p146, %p147
      %p149 = scmp.ne.s32.totalorder %s138, %s139
      %p150 = scmp.eq.s32.totalorder %s20, 0
      %p151 = por %p149, %p150
      %p152 = scmp.ne.s32.totalorder %s138, %s139
      %p153 = scmp.eq.s32.totalorder %s21, 1
      %p154 = por %p152, %p153
      %p156 = scmp.ne.s32.totalorder %s139, %s155
      %p157 = scmp.eq.s32.totalorder %s21, 0
      %p158 = por %p156, %p157
      %p159 = scmp.le.s32.totalorder 1, %s15
      %p160 = scmp.lt.s32.totalorder %s15, 3
      %p161 = pnand %p159, %p160
      %p162 = pneg %p161
      // Predicated region
      $region9: #{tpu_custom_call.1} parent=5 // pred_check
        _
      $region10: #{tpu_custom_call.1} parent=5 // pred_check_branch
        %164 = sbr.rel (%p161) target = $region12
      $region11: #{tpu_custom_call.1} parent=5 // pred_region
        %s165 = ssub.s32 %s15, 1
        // Predicated region
        $region13: #{tpu_custom_call.1} parent=11 // pred_check
          %p166 = pneg %p62
        $region14: #{tpu_custom_call.1} parent=11 // pred_check_branch
          %168 = sbr.rel (%p166) target = $region16
        $region15: #{tpu_custom_call.1} parent=11 // pred_region
          _
        $region16: #{tpu_custom_call.1} parent=11 // pred_fallthru
          _
        // Predicated region
        $region17: #{tpu_custom_call.1} parent=11 // pred_check
          %p169 = pneg %p83
        $region18: #{tpu_custom_call.1} parent=11 // pred_check_branch
          %171 = sbr.rel (%p169) target = $region20
        $region19: #{tpu_custom_call.1} parent=11 // pred_region
          _
        $region20: #{tpu_custom_call.1} parent=11 // pred_fallthru
          _
        // Predicated region
        $region21: #{tpu_custom_call.1} parent=11 // pred_check
          %p172 = pneg %p104
        $region22: #{tpu_custom_call.1} parent=11 // pred_check_branch
          %174 = sbr.rel (%p172) target = $region24
        $region23: #{tpu_custom_call.1} parent=11 // pred_region
          %176 = vsyncadd [#allocation3], 0
          %s177 = sshll.u32 %s3, 4
          %s178 = int_to_ptr.hbm [resolvable:$true] %s177
          %s179 = sshll.u32 [#allocation2], 4
          %s180 = int_to_ptr.vmem [resolvable:$true] %s179
          %185 = dma.hbm_to_vmem [thread:$0]  %s178, 1024, %s180, [#allocation3], 64, 64, 4
        $region24: #{tpu_custom_call.1} parent=11 // pred_fallthru
          _
        // Predicated region
        $region25: #{tpu_custom_call.1} parent=11 // pred_check
          %p186 = pneg %p125
        $region26: #{tpu_custom_call.1} parent=11 // pred_check_branch
          %188 = sbr.rel (%p186) target = $region28
        $region27: #{tpu_custom_call.1} parent=11 // pred_region
          _
        $region28: #{tpu_custom_call.1} parent=11 // pred_fallthru
          _
      $region12: #{tpu_custom_call.1} parent=5 // pred_fallthru
        _
      %p189 = scmp.lt.s32.totalorder %s15, 2
      // Predicated region
      $region29: #{tpu_custom_call.1} parent=5 // pred_check
        %p190 = pneg %p189
      $region30: #{tpu_custom_call.1} parent=5 // pred_check_branch
        %192 = sbr.rel (%p190) target = $region32
      $region31: #{tpu_custom_call.1} parent=5 // pred_region
        // Predicated region
        $region33: #{tpu_custom_call.1} parent=31 // pred_check
          %p193 = pneg %p35
        $region34: #{tpu_custom_call.1} parent=31 // pred_check_branch
          %195 = sbr.rel (%p193) target = $region36
        $region35: #{tpu_custom_call.1} parent=31 // pred_region
          %p196 = scmp.lt.s32.totalorder %s15, 1
          %s197 = scalar_select %p196, %s15, 1
          %s198 = smul.addr %s197, 2
          %s199 = smul.addr %s198, 4
          %s200 = scalar_lea.vmem %s0, %s199
        $region36: #{tpu_custom_call.1} parent=31 // pred_fallthru
          _
      $region32: #{tpu_custom_call.1} parent=5 // pred_fallthru
        _
      %p201 = scmp.le.s32.totalorder 1, %s15
      %p202 = scmp.lt.s32.totalorder %s15, 3
      %p203 = pnand %p201, %p202
      %p204 = pneg %p203
      // Predicated region
      $region37: #{tpu_custom_call.1} parent=5 // pred_check
        _
      $region38: #{tpu_custom_call.1} parent=5 // pred_check_branch
        %206 = sbr.rel (%p203) target = $region40
      $region39: #{tpu_custom_call.1} parent=5 // pred_region
        %s207 = ssub.s32 %s15, 1
        // Predicated region
        $region41: #{tpu_custom_call.1} parent=39 // pred_check
          %p208 = pneg %p104
        $region42: #{tpu_custom_call.1} parent=39 // pred_check_branch
          %210 = sbr.rel (%p208) target = $region44
        $region43: #{tpu_custom_call.1} parent=39 // pred_region
          %212 = dma.done [#allocation3], 1024
        $region44: #{tpu_custom_call.1} parent=39 // pred_fallthru
          _
        %p213 = scmp.lt.s32.totalorder %s20, 1
        %s214 = scalar_select %p213, %s20, 1
        %s215 = smul.addr %s214, 2
        %s216 = smul.addr %s215, 4
        %s217 = scalar_lea.vmem %s0, %s216
        %p218 = pneg %p41
        %p219 = pneg %p38
        %p220 = pneg %p62
        %p221 = pneg %p59
        %p222 = pneg %p83
        %p223 = pneg %p80
        %p224 = pneg %p104
        %p225 = pneg %p101
        %p226 = pneg %p125
        %p227 = pneg %p122
        %p228 = pneg %p151
        %p229 = pneg %p148
        %s230 = sand.u32 %s138, 1
        %s231 = scalar_lea.sflag [#allocation4], %s230
        %s232 = sand.u32 %s138, 1
        %s233 = scalar_lea.vmem [#allocation5], %s232
        %p234 = scmp.lt.s32.totalorder %s20, 1
        %s235 = scalar_select %p234, %s20, 1
        %s236 = smul.addr %s235, 2
        %s237 = smul.addr %s236, 4
        %s238 = scalar_lea.vmem %s0, %s237
        %v240 = vld [vmem:[%s238] sm:$0xf]
        %v241 = vld [vmem:[%s238 + $0x4] sm:$0xf]
        %v242 = vld [vmem:[%s1] sm:$0x3]
        %v243 = vld [vmem:[%s2] sm:$0x1]
        %v245 = vperm.slane %v243, 0
        %v249 = vunpack.c.l.b16 %v240
        %v250 = vunpack.c.l.b16 %v241
        %v251 = vpack.c.b16 %v250, %v249
        %vm252 = vcmask 23552
        %v254 = vsel %vm252, %v251, 0
        %vm256 = vcmask 1040384
        %vm257 = vcmask 1041408
        %v258 = vsel %vm256, 4294967295, 65535
        %v259 = vsel %vm257, %v258, 0
        %v261 = vand.u32 %v242, %v259
        %263 = vmatpush.bf16.msra.mxu0 0
        %264 = vmatpush.bf16.msra.mxu0 0
        %265 = vmatpush.bf16.msra.mxu0 0
        %266 = vmatpush.bf16.msra.mxu0 0
        %267 = vmatpush.bf16.msra.mxu0 0
        %268 = vmatpush.bf16.msra.mxu0 0
        %269 = vmatpush.bf16.msra.mxu0 0
        %270 = vmatpush.bf16.msra.mxu0 %v261
        %271 = vmatmul.bf16.gmra.mxu0 %v254
        %v272 = vpop.f32.mrf.mxu0
        %v273 = vadd.f32 %v245, %v272
        %v274 = vpop.f32.mrf.mxu0
        %v275 = vadd.f32 %v245, %v274
        %276 = vdwg.mxu0
        %v277 = vmax.f32 %v273, 0.0
        %v278 = vmax.f32 %v275, 0.0
        %v279 = vpack.c.bf16 %v278, %v277
        %v280 = vld [vmem:[#allocation2] sm:$0xf]
        %v281 = vld [vmem:[#allocation2 + $0x4] sm:$0xf]
        %v282 = vld [vmem:[#allocation2 + $0x8] sm:$0xf]
        %v283 = vld [vmem:[#allocation2 + $0xc] sm:$0xf]
        %v284 = vld [vmem:[#allocation2 + $0x10] sm:$0xf]
        %v285 = vld [vmem:[#allocation2 + $0x14] sm:$0xf]
        %v286 = vld [vmem:[#allocation2 + $0x18] sm:$0xf]
        %v287 = vld [vmem:[#allocation2 + $0x1c] sm:$0xf]
        %v288 = vld [vmem:[#allocation2 + $0x20] sm:$0xf]
        %v289 = vld [vmem:[#allocation2 + $0x24] sm:$0xf]
        %v290 = vld [vmem:[#allocation2 + $0x28] sm:$0xf]
        %v291 = vld [vmem:[#allocation2 + $0x2c] sm:$0xf]
        %v292 = vld [vmem:[#allocation2 + $0x30] sm:$0xf]
        %v293 = vld [vmem:[#allocation2 + $0x34] sm:$0xf]
        %v294 = vld [vmem:[#allocation2 + $0x38] sm:$0xf]
        %v295 = vld [vmem:[#allocation2 + $0x3c] sm:$0xf]
        %v296 = vld [vmem:[%s4] sm:$0x1]
        %v298 = vperm.slane %v296, 0
        %v316 = vunpack.c.l.b16 %v280
        %v317 = vunpack.c.l.b16 %v281
        %v318 = vunpack.c.l.b16 %v282
        %v319 = vunpack.c.l.b16 %v283
        %v320 = vunpack.c.l.b16 %v284
        %v321 = vunpack.c.l.b16 %v285
        %v322 = vunpack.c.l.b16 %v286
        %v323 = vunpack.c.l.b16 %v287
        %v324 = vunpack.c.l.b16 %v288
        %v325 = vunpack.c.l.b16 %v289
        %v326 = vunpack.c.l.b16 %v290
        %v327 = vunpack.c.l.b16 %v291
        %v328 = vunpack.c.l.b16 %v292
        %v329 = vunpack.c.l.b16 %v293
        %v330 = vunpack.c.l.b16 %v294
        %v331 = vunpack.c.l.b16 %v295
        %v332 = vpack.c.b16 %v317, %v316
        %v333 = vpack.c.b16 %v319, %v318
        %v334 = vpack.c.b16 %v321, %v320
        %v335 = vpack.c.b16 %v323, %v322
        %v336 = vpack.c.b16 %v325, %v324
        %v337 = vpack.c.b16 %v327, %v326
        %v338 = vpack.c.b16 %v329, %v328
        %v339 = vpack.c.b16 %v331, %v330
        %348 = vmatpush.bf16.msra.mxu0 %v339
        %349 = vmatpush.bf16.msra.mxu0 %v338
        %350 = vmatpush.bf16.msra.mxu0 %v337
        %351 = vmatpush.bf16.msra.mxu0 %v336
        %352 = vmatpush.bf16.msra.mxu0 %v335
        %353 = vmatpush.bf16.msra.mxu0 %v334
        %354 = vmatpush.bf16.msra.mxu0 %v333
        %355 = vmatpush.bf16.msra.mxu0 %v332
        %356 = vmatmul.bf16.gmra.mxu0 %v279
        %v357 = vpop.f32.mrf.mxu0
        %v358 = vadd.f32 %v298, %v357
        %v359 = vpop.f32.mrf.mxu0
        %v360 = vadd.f32 %v298, %v359
        %361 = vdwg.mxu0
        %v362 = vlaneseq
        %v363 = vshrl.u32 %v362, 7
        %v364 = vadd.s32 %v363, 8
        %vm365 = vcmp.lt.s32.totalorder %v363, 8
        %vm366 = vcmp.lt.s32.totalorder %v364, 8
        %v367 = vsel %vm365, %v358, 0.0
        %v368 = vsel %vm366, %v360, 0.0
        %v369 = vadd.f32 %v367, %v368
        %v370 = vrot.slane %v369, 4
        %v371 = vadd.f32 %v369, %v370
        %v372 = vrot.slane %v371, 2
        %v373 = vadd.f32 %v371, %v372
        %v374 = vrot.slane %v373, 1
        %v375 = vadd.f32 %v373, %v374
        %v376 = vmul.f32 %v375, 0.125
        %377 = vst [vmem:[%s233] sm:$0x1] %v376
        %s378 = sand.u32 %s138, 1
        %s379 = scalar_lea.sflag [#allocation4], %s378
        %s380 = sand.u32 %s138, 1
        %s381 = scalar_lea.vmem [#allocation5], %s380
        // Predicated region
        $region45: #{tpu_custom_call.1} parent=39 // pred_check
          %p382 = pneg %p148
        $region46: #{tpu_custom_call.1} parent=39 // pred_check_branch
          %384 = sbr.rel (%p382) target = $region48
        $region47: #{tpu_custom_call.1} parent=39 // pred_region
          %386 = vsyncadd %s379, 0
          %s387 = scalar_lea.hbm %s5, %s20
          %s389 = sshll.u32 %s381, 4
          %s390 = int_to_ptr.vmem [resolvable:$true] %s389
          %s391 = sshll.u32 %s387, 4
          %s392 = int_to_ptr.hbm [resolvable:$true] %s391
          %394 = dma.vmem_to_hbm [thread:$0]  %s390, 16, %s392, %s379
        $region48: #{tpu_custom_call.1} parent=39 // pred_fallthru
          _
      $region40: #{tpu_custom_call.1} parent=5 // pred_fallthru
        _
      %p395 = scmp.le.s32.totalorder 2, %s15
      // Predicated region
      $region49: #{tpu_custom_call.1} parent=5 // pred_check
        %p396 = pneg %p395
      $region50: #{tpu_custom_call.1} parent=5 // pred_check_branch
        %398 = sbr.rel (%p396) target = $region52
      $region51: #{tpu_custom_call.1} parent=5 // pred_region
        %s399 = ssub.s32 %s15, 2
        // Predicated region
        $region53: #{tpu_custom_call.1} parent=51 // pred_check
          %p400 = pneg %p154
        $region54: #{tpu_custom_call.1} parent=51 // pred_check_branch
          %402 = sbr.rel (%p400) target = $region56
        $region55: #{tpu_custom_call.1} parent=51 // pred_region
          %s403 = sand.u32 %s139, 1
          %s404 = scalar_lea.sflag [#allocation4], %s403
          %s405 = sand.u32 %s139, 1
          %s406 = scalar_lea.vmem [#allocation5], %s405
          %408 = dma.done %s404, 16
        $region56: #{tpu_custom_call.1} parent=51 // pred_fallthru
          _
      $region52: #{tpu_custom_call.1} parent=5 // pred_fallthru
        _
    $region6: #{tpu_custom_call.1} parent=1 // loop_footer
      %s19 = sadd.s32 1, %s15
    $region7: #{tpu_custom_call.1} parent=1 // loop_footer_branch
      %14 = sbr.rel target = $region3
    $region8: #{tpu_custom_call.1} parent=1 // loop_exit
      _
    %409 = vsyncpa [#allocation3], 1
    %s410 = scalar_lea.sflag [#allocation3], 1
    %411 = vsyncpa %s410, 1
    %412 = vsyncpa [#allocation4], 1
    %s413 = scalar_lea.sflag [#allocation4], 1
    %414 = vsyncpa %s413, 1

</llo_original>
